<compile_context>
chip_gen: v6e
topology: v6e:2x2x1
jax: 0.10.0
libtpu: 0.0.40
codegen_flags: <defaults>
</compile_context>

<pallas_src>
import jax
import jax.numpy as jnp
from jax.experimental import pallas as pl
from jax.experimental.pallas import tpu as pltpu


def time_embedding_kernel(x_ref, w1_ref, b1_ref, w2_ref, b2_ref, out_ref):
    # Cast the f32 input tile to bf16 in-kernel (free on the VPU, hidden
    # under the input DMA) so the MXU runs bf16 x bf16 with f32 accumulation.
    x = x_ref[...].astype(jnp.bfloat16)

    # linear_1 + bias (bias / accumulation in f32).
    h = jnp.dot(x, w1_ref[...], preferred_element_type=jnp.float32) + b1_ref[...]

    # SiLU in f32: h * sigmoid(h)  (sigmoid goes to the EUP slot).
    h = h * jax.nn.sigmoid(h)

    # linear_2: cast activations to bf16 for the MXU, accumulate f32.
    out = jnp.dot(h.astype(jnp.bfloat16), w2_ref[...],
                  preferred_element_type=jnp.float32) + b2_ref[...]

    out_ref[...] = out.astype(out_ref.dtype)


def prepare_time_embedding_params(w1, b1, w2, b2):
    """One-time (module init) parameter prep: bf16 weights, f32 2-D biases.

    Do this ONCE and reuse the result for every call -- doing the astype per
    call would re-read the f32 weights from HBM every invocation.
    """
    d_hid = w1.shape[1]
    return (
        w1.astype(jnp.bfloat16),                       # (d_emb, 4d)
        b1.reshape(1, d_hid).astype(jnp.float32),      # (1, 4d)
        w2.astype(jnp.bfloat16),                       # (4d, 4d)
        b2.reshape(1, d_hid).astype(jnp.float32),      # (1, 4d)
    )


def _default_num_splits():
    """2 batch splits on v7x (one per TensorCore), 1 otherwise (v5e/v6e)."""
    try:
        kind = jax.devices()[0].device_kind.lower()
        if "v7" in kind:
            return 2
    except Exception:
        pass
    return 1


def time_embedding(time, params, *, num_splits=None, out_dtype=None):
    """time: (B, d_emb) f32; params from prepare_time_embedding_params().

    Batch is tiled so the grid has exactly `num_splits` steps (1 on v5e/v6e,
    2 on v7x); weights stay VMEM-resident (constant index map, Buffered(1)).
    """
    w1, b1, w2, b2 = params
    B, d_emb = time.shape
    d_hid = w1.shape[1]  # 4 * d_emb
    if out_dtype is None:
        out_dtype = time.dtype  # TODO(synk): pass jnp.bfloat16 if the
        #   downstream UNet conditioning accepts it -- halves output HBM bytes.
    if num_splits is None:
        num_splits = _default_num_splits()

    # Batch tile: one grid step per TensorCore. bb is either exactly B
    # (single step; block == full dim satisfies the (8,128) rule) or a
    # multiple of 8 (partial last block rows are simply dropped on store).
    if num_splits <= 1 or B <= 8:
        bb = B
    else:
        bb = ((pl.cdiv(B, num_splits) + 7) // 8) * 8
        bb = min(bb, B)
    grid = (pl.cdiv(B, bb),)

    # Advisory cost so XLA can overlap this tiny call with neighboring work.
    out_itemsize = jnp.dtype(out_dtype).itemsize
    cost = pl.CostEstimate(
        flops=2 * B * d_hid * (d_emb + d_hid),
        transcendentals=B * d_hid,
        bytes_accessed=(B * d_emb * time.dtype.itemsize        # input
                        + (d_emb + d_hid) * d_hid * 2          # bf16 weights
                        + 2 * d_hid * 4                        # f32 biases
                        + B * d_hid * out_itemsize),           # output
    )

    # Constant-index (resident) blocks: single-buffered, never re-fetched.
    resident = pl.Buffered(1)

    return pl.pallas_call(
        time_embedding_kernel,
        out_shape=jax.ShapeDtypeStruct((B, d_hid), out_dtype),
        grid=grid,
        in_specs=[
            pl.BlockSpec((bb, d_emb), lambda i: (i, 0)),        # x tile (f32)
            pl.BlockSpec((d_emb, d_hid), lambda i: (0, 0),
                         pipeline_mode=resident),               # w1
            pl.BlockSpec((1, d_hid), lambda i: (0, 0),
                         pipeline_mode=resident),               # b1
            pl.BlockSpec((d_hid, d_hid), lambda i: (0, 0),
                         pipeline_mode=resident),               # w2
            pl.BlockSpec((1, d_hid), lambda i: (0, 0),
                         pipeline_mode=resident),               # b2
        ],
        out_specs=pl.BlockSpec((bb, d_hid), lambda i: (i, 0)),
        compiler_params=pltpu.CompilerParams(
            dimension_semantics=("parallel",)
        ),
        cost_estimate=cost,
    )(time, w1, b1, w2, b2)


def reference(time, w1, b1, w2, b2):
    h = time @ w1 + b1
    h = h * jax.nn.sigmoid(h)
    return h @ w2 + b2


if __name__ == "__main__":
    key = jax.random.PRNGKey(0)
    d_emb = 32
    d_hid = 4 * d_emb  # 128

    k_x, k_w1, k_b1, k_w2, k_b2, k_xb = jax.random.split(key, 6)

    # Deterministic synthetic parameters (PyTorch nn.Linear shapes,
    # pre-transposed to (in, out)).
    w1 = jax.random.normal(k_w1, (d_emb, d_hid), dtype=jnp.float32) * 0.05
    b1 = jax.random.normal(k_b1, (d_hid,), dtype=jnp.float32) * 0.05
    w2 = jax.random.normal(k_w2, (d_hid, d_hid), dtype=jnp.float32) * 0.05
    b2 = jax.random.normal(k_b2, (d_hid,), dtype=jnp.float32) * 0.05

    # One-time parameter prep (module init) -- NOT per forward call.
    params = jax.block_until_ready(prepare_time_embedding_params(w1, b1, w2, b2))

    # Case 1: tiny per-step batch (matches module usage), single grid step.
    B_small = 2
    x_small = jax.random.normal(k_x, (B_small, d_emb), dtype=jnp.float32)
    out_small = jax.block_until_ready(time_embedding(x_small, params))
    ref_small = reference(x_small, w1, b1, w2, b2)
    assert out_small.shape == (B_small, d_hid), out_small.shape
    # bf16 weights/activations -> loosened tolerance vs the f32 reference.
    assert jnp.allclose(out_small, ref_small, atol=3e-2, rtol=3e-2), \
        "mismatch vs reference (small batch)"

    # Case 2: ALL diffusion timesteps embedded in ONE call (amortizes the
    # launch + weight traffic across the whole schedule; on v7x the batch is
    # split across both TensorCores, on v5e/v6e it is a single grid step).
    B_big = 512
    x_big = jax.random.normal(k_xb, (B_big, d_emb), dtype=jnp.float32)
    out_big = jax.block_until_ready(time_embedding(x_big, params))
    ref_big = reference(x_big, w1, b1, w2, b2)
    assert out_big.shape == (B_big, d_hid), out_big.shape
    assert jnp.allclose(out_big, ref_big, atol=3e-2, rtol=3e-2), \
        "mismatch vs reference (batched)"

    print("KERNEL_OK")
</pallas_src>

<mosaic_0001>
module attributes {stable_mosaic.version = 11 : i64} {
  func.func @time_embedding_kernel(%arg0: i32, %arg1: memref<2x32xf32, #tpu.memory_space<vmem>>, %arg2: memref<32x128xbf16, #tpu.memory_space<vmem>>, %arg3: memref<1x128xf32, #tpu.memory_space<vmem>>, %arg4: memref<128x128xbf16, #tpu.memory_space<vmem>>, %arg5: memref<1x128xf32, #tpu.memory_space<vmem>>, %arg6: memref<2x128xf32, #tpu.memory_space<vmem>>) attributes {dimension_semantics = [#tpu.dimension_semantics<parallel>], iteration_bounds = array<i64: 1>, scalar_prefetch = 0 : i64, scratch_operands = 0 : i64, tpu.core_type = #tpu.core_type<tc>, window_params = [{transform_indices = @transform_0, window_bounds = array<i64: 2, 32>}, {pipeline_mode = #tpu.pipeline_mode<synchronous>, transform_indices = @transform_1, window_bounds = array<i64: 32, 128>}, {pipeline_mode = #tpu.pipeline_mode<synchronous>, transform_indices = @transform_2, window_bounds = array<i64: 1, 128>}, {pipeline_mode = #tpu.pipeline_mode<synchronous>, transform_indices = @transform_3, window_bounds = array<i64: 128, 128>}, {pipeline_mode = #tpu.pipeline_mode<synchronous>, transform_indices = @transform_4, window_bounds = array<i64: 1, 128>}, {transform_indices = @transform_5, window_bounds = array<i64: 2, 128>}]} {
    %c0 = arith.constant 0 : index
    %c0_0 = arith.constant 0 : index
    %0 = vector.load %arg1[%c0, %c0_0] : memref<2x32xf32, #tpu.memory_space<vmem>>, vector<2x32xf32>
    %1 = arith.truncf %0 : vector<2x32xf32> to vector<2x32xbf16>
    %c0_1 = arith.constant 0 : index
    %c0_2 = arith.constant 0 : index
    %2 = vector.load %arg2[%c0_1, %c0_2] : memref<32x128xbf16, #tpu.memory_space<vmem>>, vector<32x128xbf16>
    %cst = arith.constant dense<0.000000e+00> : vector<2x128xf32>
    %3 = tpu.matmul %1, %2, %cst {dimension_numbers = #tpu.dot_dimension_numbers<[1], [0], [0], [1], [0, 0, 1, 1], [], []>} : vector<2x32xbf16>, vector<32x128xbf16>, vector<2x128xf32> -> vector<2x128xf32>
    %c0_3 = arith.constant 0 : index
    %c0_4 = arith.constant 0 : index
    %4 = vector.load %arg3[%c0_3, %c0_4] : memref<1x128xf32, #tpu.memory_space<vmem>>, vector<1x128xf32>
    %5 = vector.broadcast %4 : vector<1x128xf32> to vector<2x128xf32>
    %6 = arith.addf %3, %5 : vector<2x128xf32>
    %7 = arith.negf %6 : vector<2x128xf32>
    %8 = math.exp %7 : vector<2x128xf32>
    %cst_5 = arith.constant 1.000000e+00 : f32
    %9 = vector.broadcast %cst_5 : f32 to vector<2x128xf32>
    %10 = arith.addf %9, %8 : vector<2x128xf32>
    %11 = arith.divf %9, %10 : vector<2x128xf32>
    %12 = arith.mulf %6, %11 : vector<2x128xf32>
    %13 = arith.truncf %12 : vector<2x128xf32> to vector<2x128xbf16>
    %c0_6 = arith.constant 0 : index
    %c0_7 = arith.constant 0 : index
    %14 = vector.load %arg4[%c0_6, %c0_7] : memref<128x128xbf16, #tpu.memory_space<vmem>>, vector<128x128xbf16>
    %cst_8 = arith.constant dense<0.000000e+00> : vector<2x128xf32>
    %15 = tpu.matmul %13, %14, %cst_8 {dimension_numbers = #tpu.dot_dimension_numbers<[1], [0], [0], [1], [0, 0, 1, 1], [], []>} : vector<2x128xbf16>, vector<128x128xbf16>, vector<2x128xf32> -> vector<2x128xf32>
    %c0_9 = arith.constant 0 : index
    %c0_10 = arith.constant 0 : index
    %16 = vector.load %arg5[%c0_9, %c0_10] : memref<1x128xf32, #tpu.memory_space<vmem>>, vector<1x128xf32>
    %17 = vector.broadcast %16 : vector<1x128xf32> to vector<2x128xf32>
    %18 = arith.addf %15, %17 : vector<2x128xf32>
    %c0_11 = arith.constant 0 : index
    %c0_12 = arith.constant 0 : index
    %19 = vector.load %arg6[%c0_11, %c0_12] : memref<2x128xf32, #tpu.memory_space<vmem>>, vector<2x128xf32>
    tpu.vector_store %arg6[%c0_11, %c0_12], %18 {strides = array<i32>} : memref<2x128xf32, #tpu.memory_space<vmem>>, vector<2x128xf32>,
    return
  }
  func.func @transform_0(%arg0: i32) -> (i32, i32) {
    %c0_i32 = arith.constant 0 : i32
    %c0_i32_0 = arith.constant 0 : i32
    return %arg0, %c0_i32 : i32, i32
  }
  func.func @transform_1(%arg0: i32) -> (i32, i32) {
    %c0_i32 = arith.constant 0 : i32
    %c0_i32_0 = arith.constant 0 : i32
    %c0_i32_1 = arith.constant 0 : i32
    return %c0_i32, %c0_i32_0 : i32, i32
  }
  func.func @transform_2(%arg0: i32) -> (i32, i32) {
    %c0_i32 = arith.constant 0 : i32
    %c0_i32_0 = arith.constant 0 : i32
    %c0_i32_1 = arith.constant 0 : i32
    return %c0_i32, %c0_i32_0 : i32, i32
  }
  func.func @transform_3(%arg0: i32) -> (i32, i32) {
    %c0_i32 = arith.constant 0 : i32
    %c0_i32_0 = arith.constant 0 : i32
    %c0_i32_1 = arith.constant 0 : i32
    return %c0_i32, %c0_i32_0 : i32, i32
  }
  func.func @transform_4(%arg0: i32) -> (i32, i32) {
    %c0_i32 = arith.constant 0 : i32
    %c0_i32_0 = arith.constant 0 : i32
    %c0_i32_1 = arith.constant 0 : i32
    return %c0_i32, %c0_i32_0 : i32, i32
  }
  func.func @transform_5(%arg0: i32) -> (i32, i32) {
    %c0_i32 = arith.constant 0 : i32
    %c0_i32_0 = arith.constant 0 : i32
    return %arg0, %c0_i32 : i32, i32
  }
}

</mosaic_0001>

<llo_original>
// kernel: tpu_custom_call.1
$region0: #{tpu_custom_call.1}
  #allocation0 [shape = 'u32[]', space=smem, size = 0x4, offset = 0x4, fixed_abs, tag = 'smem constant byte address 0x4 - core index']
  #allocation1 [shape = 'u32[144,128]{1,0:T(1,128)}', space=vmem, size = 0x12000, scoped, tag = 'internal scratch']
  %s0 = inlined_call_operand.hbm [shape: f32[2,32], index: 0, kind: input, shape index: {}]
  %s1 = inlined_call_operand.hbm [shape: bf16[32,128], index: 1, kind: input, shape index: {}]
  %s2 = inlined_call_operand.vmem [shape: f32[1,128], index: 2, kind: input, shape index: {}]
  %s3 = inlined_call_operand.hbm [shape: bf16[128,128], index: 3, kind: input, shape index: {}]
  %s4 = inlined_call_operand.vmem [shape: f32[1,128], index: 4, kind: input, shape index: {}]
  %s5 = inlined_call_operand.hbm [shape: f32[2,128], index: 5, kind: output, shape index: {}]
  %s6 = sld [smem:[#allocation0]]
  $region42: #{tpu_custom_call.1} parent=0
    _
  %s8 = ssub.s32 1, %s6
  %s9 = scalar_select 0, %s8, %s6
  $region1: #{tpu_custom_call.1} parent=0
    #allocation2 [shape = 'u8[1024]{0}', space=vmem, size = 0x400, scoped, tag = 'input window, operand 0, single buffered']
    #allocation3 [shape = 's32[1]{0}', space=sflag, size = 0x4, scoped, tag = 'scoped memory for tpu_custom_call.1']
    #allocation4 [shape = 's32[1]{0}', space=sflag, size = 0x4, scoped, tag = 'scoped memory for tpu_custom_call.1']
    #allocation5 [shape = 'u8[8192]{0}', space=vmem, size = 0x2000, scoped, tag = 'input window, operand 1, single buffered']
    #allocation6 [shape = 's32[1]{0}', space=sflag, size = 0x4, scoped, tag = 'scoped memory for tpu_custom_call.1']
    #allocation7 [shape = 'u8[32768]{0}', space=vmem, size = 0x8000, scoped, tag = 'input window, operand 3, single buffered']
    #allocation8 [shape = 'u8[1024]{0}', space=vmem, size = 0x400, scoped, tag = 'output window, operand 0, single buffered']
    %10 = vsyncpa [#allocation3], 0
    %11 = vsyncpa [#allocation6], 0
    %12 = vsyncpa [#allocation4], 0
    // Predicated region
    $region2: #{tpu_custom_call.1} parent=1 // pred_check
      _
    $region3: #{tpu_custom_call.1} parent=1 // pred_check_branch
      %14 = sbr.rel (0) target = $region5
    $region4: #{tpu_custom_call.1} parent=1 // pred_region
      %s16 = ssub.s32 32, 32
      %17 = vsyncadd [#allocation3], %s16
      %s19 = sshll.u32 [#allocation2], 4
      %s20 = int_to_ptr.vmem [resolvable:$true] %s19
      %22 = dma.hbm_to_vmem [thread:$0]  %s0, 32, %s20, [#allocation3]
    $region5: #{tpu_custom_call.1} parent=1 // pred_fallthru
      _
    // Predicated region
    $region6: #{tpu_custom_call.1} parent=1 // pred_check
      _
    $region7: #{tpu_custom_call.1} parent=1 // pred_check_branch
      %24 = sbr.rel (0) target = $region9
    $region8: #{tpu_custom_call.1} parent=1 // pred_region
      %s26 = ssub.s32 256, 256
      %27 = vsyncadd [#allocation6], %s26
      %s28 = sshll.u32 [#allocation5], 4
      %s29 = int_to_ptr.vmem [resolvable:$true] %s28
      %34 = dma.hbm_to_vmem [thread:$0]  %s1, 256, %s29, [#allocation6], 64, 64, 4
    $region9: #{tpu_custom_call.1} parent=1 // pred_fallthru
      _
    // Predicated region
    $region10: #{tpu_custom_call.1} parent=1 // pred_check
      _
    $region11: #{tpu_custom_call.1} parent=1 // pred_check_branch
      %36 = sbr.rel (0) target = $region13
    $region12: #{tpu_custom_call.1} parent=1 // pred_region
      _
    $region13: #{tpu_custom_call.1} parent=1 // pred_fallthru
      _
    // Predicated region
    $region14: #{tpu_custom_call.1} parent=1 // pred_check
      _
    $region15: #{tpu_custom_call.1} parent=1 // pred_check_branch
      %38 = sbr.rel (0) target = $region17
    $region16: #{tpu_custom_call.1} parent=1 // pred_region
      %s40 = ssub.s32 1024, 1024
      %41 = vsyncadd [#allocation6], %s40
      %s42 = sshll.u32 [#allocation7], 4
      %s43 = int_to_ptr.vmem [resolvable:$true] %s42
      %48 = dma.hbm_to_vmem [thread:$0]  %s3, 1024, %s43, [#allocation6], 64, 64, 4
    $region17: #{tpu_custom_call.1} parent=1 // pred_fallthru
      _
    // Predicated region
    $region18: #{tpu_custom_call.1} parent=1 // pred_check
      _
    $region19: #{tpu_custom_call.1} parent=1 // pred_check_branch
      %50 = sbr.rel (0) target = $region21
    $region20: #{tpu_custom_call.1} parent=1 // pred_region
      _
    $region21: #{tpu_custom_call.1} parent=1 // pred_fallthru
      _
    // Predicated region
    $region22: #{tpu_custom_call.1} parent=1 // pred_check
      _
    $region23: #{tpu_custom_call.1} parent=1 // pred_check_branch
      %52 = sbr.rel (0) target = $region25
    $region24: #{tpu_custom_call.1} parent=1 // pred_region
      %53 = dma.done [#allocation3], 32
    $region25: #{tpu_custom_call.1} parent=1 // pred_fallthru
      _
    // Predicated region
    $region26: #{tpu_custom_call.1} parent=1 // pred_check
      _
    $region27: #{tpu_custom_call.1} parent=1 // pred_check_branch
      %55 = sbr.rel (0) target = $region29
    $region28: #{tpu_custom_call.1} parent=1 // pred_region
      %56 = dma.done [#allocation6], 256
    $region29: #{tpu_custom_call.1} parent=1 // pred_fallthru
      _
    // Predicated region
    $region30: #{tpu_custom_call.1} parent=1 // pred_check
      _
    $region31: #{tpu_custom_call.1} parent=1 // pred_check_branch
      %58 = sbr.rel (0) target = $region33
    $region32: #{tpu_custom_call.1} parent=1 // pred_region
      %59 = dma.done [#allocation6], 1024
    $region33: #{tpu_custom_call.1} parent=1 // pred_fallthru
      _
    %v61 = vld [vmem:[#allocation2] sm:$0x3]
    %v62 = vpack.c.bf16 %v61, %v61
    %v63 = vld [vmem:[#allocation5] sm:$0xf]
    %v64 = vld [vmem:[#allocation5 + $0x4] sm:$0xf]
    %v65 = vld [vmem:[#allocation5 + $0x8] sm:$0xf]
    %v66 = vld [vmem:[#allocation5 + $0xc] sm:$0xf]
    %v67 = vld [vmem:[%s2] sm:$0x1]
    %v69 = vlaneseq
    %v70 = vshrl.u32 %v69, 7
    %v71 = vsub.s32 0, %v70
    %v72 = vrot.slane %v67, %v71
    %v78 = vunpack.c.l.b16 %v63
    %v79 = vunpack.c.l.b16 %v64
    %v80 = vunpack.c.l.b16 %v65
    %v81 = vunpack.c.l.b16 %v66
    %v82 = vpack.c.b16 %v79, %v78
    %v83 = vpack.c.b16 %v81, %v80
    %vm86 = vcmask 261120
    %v88 = vsel %vm86, %v62, 0
    %90 = vmatprep.subr.bf16.mxu0 0
    %91 = vmatpush1.bf16.msra.mxu0 0
    %92 = vmatprep.subr.bf16.mxu0 0
    %93 = vmatpush1.bf16.msra.mxu0 0
    %94 = vmatprep.subr.bf16.mxu0 0
    %95 = vmatpush1.bf16.msra.mxu0 0
    %96 = vmatprep.subr.bf16.mxu0 0
    %97 = vmatpush1.bf16.msra.mxu0 0
    %98 = vmatprep.subr.bf16.mxu0 0
    %99 = vmatpush1.bf16.msra.mxu0 0
    %100 = vmatprep.subr.bf16.mxu0 0
    %101 = vmatpush1.bf16.msra.mxu0 0
    %102 = vmatprep.subr.bf16.mxu0 0
    %103 = vmatpush1.bf16.msra.mxu0 %v83
    %104 = vmatprep.subr.bf16.mxu0 0
    %105 = vmatpush1.bf16.msra.mxu0 %v82
    %106 = vmatprep.subr.bf16.mxu0 0
    %107 = vmatpush2.bf16.msra.mxu0 0
    %108 = vmatprep.subr.bf16.mxu0 0
    %109 = vmatpush2.bf16.msra.mxu0 0
    %110 = vmatprep.subr.bf16.mxu0 0
    %111 = vmatpush2.bf16.msra.mxu0 0
    %112 = vmatprep.subr.bf16.mxu0 0
    %113 = vmatpush2.bf16.msra.mxu0 0
    %114 = vmatprep.subr.bf16.mxu0 0
    %115 = vmatpush2.bf16.msra.mxu0 0
    %116 = vmatprep.subr.bf16.mxu0 0
    %117 = vmatpush2.bf16.msra.mxu0 0
    %118 = vmatprep.subr.bf16.mxu0 0
    %119 = vmatpush2.bf16.msra.mxu0 0
    %120 = vmatprep.subr.bf16.mxu0 0
    %121 = vmatpush2.bf16.msra.mxu0 0
    %122 = vmatprep.mubr.bf16.mxu0 0
    %123 = vmatmul.mubr.bf16.gmra.mxu0 %v88
    %v124 = vpop.f32.mrf.mxu0
    %v125 = vadd.f32 %v72, %v124
    %v126 = vpop.f32.mrf.mxu0
    %v127 = vpop.f32.mrf.mxu0
    %v128 = vpop.f32.mrf.mxu0
    %129 = vdwg.mxu0
    %v130 = vxor.u32 %v125, 2147483648
    %v131 = vmul.f32 %v130, 1.442695
    %v132 = vpow.pop %v131
    %v133 = vadd.f32 %v132, 1.0
    %v134 = vrcp.pop %v133
    %v135 = vmul.f32 1.0, %v134
    %v136 = vmul.f32 %v125, %v135
    %v137 = vpack.c.bf16 %v136, %v136
    %v138 = vld [vmem:[#allocation7] sm:$0xf]
    %v139 = vld [vmem:[#allocation7 + $0x4] sm:$0xf]
    %v140 = vld [vmem:[#allocation7 + $0x8] sm:$0xf]
    %v141 = vld [vmem:[#allocation7 + $0xc] sm:$0xf]
    %v142 = vld [vmem:[#allocation7 + $0x10] sm:$0xf]
    %v143 = vld [vmem:[#allocation7 + $0x14] sm:$0xf]
    %v144 = vld [vmem:[#allocation7 + $0x18] sm:$0xf]
    %v145 = vld [vmem:[#allocation7 + $0x1c] sm:$0xf]
    %v146 = vld [vmem:[#allocation7 + $0x20] sm:$0xf]
    %v147 = vld [vmem:[#allocation7 + $0x24] sm:$0xf]
    %v148 = vld [vmem:[#allocation7 + $0x28] sm:$0xf]
    %v149 = vld [vmem:[#allocation7 + $0x2c] sm:$0xf]
    %v150 = vld [vmem:[#allocation7 + $0x30] sm:$0xf]
    %v151 = vld [vmem:[#allocation7 + $0x34] sm:$0xf]
    %v152 = vld [vmem:[#allocation7 + $0x38] sm:$0xf]
    %v153 = vld [vmem:[#allocation7 + $0x3c] sm:$0xf]
    %v154 = vld [vmem:[%s4] sm:$0x1]
    %v156 = vlaneseq
    %v157 = vshrl.u32 %v156, 7
    %v158 = vsub.s32 0, %v157
    %v159 = vrot.slane %v154, %v158
    %v177 = vunpack.c.l.b16 %v138
    %v178 = vunpack.c.l.b16 %v139
    %v179 = vunpack.c.l.b16 %v140
    %v180 = vunpack.c.l.b16 %v141
    %v181 = vunpack.c.l.b16 %v142
    %v182 = vunpack.c.l.b16 %v143
    %v183 = vunpack.c.l.b16 %v144
    %v184 = vunpack.c.l.b16 %v145
    %v185 = vunpack.c.l.b16 %v146
    %v186 = vunpack.c.l.b16 %v147
    %v187 = vunpack.c.l.b16 %v148
    %v188 = vunpack.c.l.b16 %v149
    %v189 = vunpack.c.l.b16 %v150
    %v190 = vunpack.c.l.b16 %v151
    %v191 = vunpack.c.l.b16 %v152
    %v192 = vunpack.c.l.b16 %v153
    %v193 = vpack.c.b16 %v178, %v177
    %v194 = vpack.c.b16 %v180, %v179
    %v195 = vpack.c.b16 %v182, %v181
    %v196 = vpack.c.b16 %v184, %v183
    %v197 = vpack.c.b16 %v186, %v185
    %v198 = vpack.c.b16 %v188, %v187
    %v199 = vpack.c.b16 %v190, %v189
    %v200 = vpack.c.b16 %v192, %v191
    %209 = vmatprep.subr.bf16.mxu0 0
    %210 = vmatpush1.bf16.msra.mxu0 %v200
    %211 = vmatprep.subr.bf16.mxu0 0
    %212 = vmatpush1.bf16.msra.mxu0 %v199
    %213 = vmatprep.subr.bf16.mxu0 0
    %214 = vmatpush1.bf16.msra.mxu0 %v198
    %215 = vmatprep.subr.bf16.mxu0 0
    %216 = vmatpush1.bf16.msra.mxu0 %v197
    %217 = vmatprep.subr.bf16.mxu0 0
    %218 = vmatpush1.bf16.msra.mxu0 %v196
    %219 = vmatprep.subr.bf16.mxu0 0
    %220 = vmatpush1.bf16.msra.mxu0 %v195
    %221 = vmatprep.subr.bf16.mxu0 0
    %222 = vmatpush1.bf16.msra.mxu0 %v194
    %223 = vmatprep.subr.bf16.mxu0 0
    %224 = vmatpush1.bf16.msra.mxu0 %v193
    %225 = vmatprep.subr.bf16.mxu0 0
    %226 = vmatpush2.bf16.msra.mxu0 0
    %227 = vmatprep.subr.bf16.mxu0 0
    %228 = vmatpush2.bf16.msra.mxu0 0
    %229 = vmatprep.subr.bf16.mxu0 0
    %230 = vmatpush2.bf16.msra.mxu0 0
    %231 = vmatprep.subr.bf16.mxu0 0
    %232 = vmatpush2.bf16.msra.mxu0 0
    %233 = vmatprep.subr.bf16.mxu0 0
    %234 = vmatpush2.bf16.msra.mxu0 0
    %235 = vmatprep.subr.bf16.mxu0 0
    %236 = vmatpush2.bf16.msra.mxu0 0
    %237 = vmatprep.subr.bf16.mxu0 0
    %238 = vmatpush2.bf16.msra.mxu0 0
    %239 = vmatprep.subr.bf16.mxu0 0
    %240 = vmatpush2.bf16.msra.mxu0 0
    %241 = vmatprep.mubr.bf16.mxu0 0
    %242 = vmatmul.mubr.bf16.gmra.mxu0 %v137
    %v243 = vpop.f32.mrf.mxu0
    %v244 = vadd.f32 %v159, %v243
    %v245 = vpop.f32.mrf.mxu0
    %v246 = vpop.f32.mrf.mxu0
    %v247 = vpop.f32.mrf.mxu0
    %248 = vdwg.mxu0
    %249 = vst [vmem:[#allocation8] sm:$0x3] %v244
    // Predicated region
    $region34: #{tpu_custom_call.1} parent=1 // pred_check
      _
    $region35: #{tpu_custom_call.1} parent=1 // pred_check_branch
      %251 = sbr.rel (0) target = $region37
    $region36: #{tpu_custom_call.1} parent=1 // pred_region
      %s253 = ssub.s32 32, 32
      %254 = vsyncadd [#allocation4], %s253
      %s256 = sshll.u32 [#allocation8], 4
      %s257 = int_to_ptr.vmem [resolvable:$true] %s256
      %259 = dma.vmem_to_hbm [thread:$0]  %s257, 32, %s5, [#allocation4]
    $region37: #{tpu_custom_call.1} parent=1 // pred_fallthru
      _
    // Predicated region
    $region38: #{tpu_custom_call.1} parent=1 // pred_check
      _
    $region39: #{tpu_custom_call.1} parent=1 // pred_check_branch
      %261 = sbr.rel (0) target = $region41
    $region40: #{tpu_custom_call.1} parent=1 // pred_region
      %262 = dma.done [#allocation4], 32
    $region41: #{tpu_custom_call.1} parent=1 // pred_fallthru
      _
    %263 = vsyncpa [#allocation3], 1
    %264 = vsyncpa [#allocation6], 1
    %265 = vsyncpa [#allocation4], 1

</llo_original>
